<compile_context>
chip_gen: v7x
topology: tpu7x:2x2x1
jax: 0.10.0
libtpu: 0.0.40
codegen_flags: <defaults>
</compile_context>

<pallas_src>
import jax
import jax.numpy as jnp
from jax.experimental import pallas as pl
from jax.experimental.pallas import tpu as pltpu


LANE = 128          # vreg lane width
SUBLANE = 8         # f32 sublane height
MAX_TILE_B = 2048   # batch rows per grid step (per-step VMEM ~7 MiB at 2048)
SPLIT_MIN_B = 128   # split into >=2 batch tiles (v7x megacore) above this B


def _round_up(n, m):
    return (n + m - 1) // m * m


def _cdiv(a, b):
    return -(-a // b)


def _pick_batch_tiling(batch):
    """Choose (tile_b, padded_B) for the batch grid."""
    n_tiles = max(1, _cdiv(batch, MAX_TILE_B))
    if batch >= SPLIT_MIN_B:
        # At least 2 (and an even number of) tiles so "parallel" grid sharding
        # keeps both v7x TensorCores busy; harmless single-core loop elsewhere.
        n_tiles = max(n_tiles, 2)
        if n_tiles % 2:
            n_tiles += 1
    tile_b = _round_up(_cdiv(batch, n_tiles), SUBLANE)
    b_pad = _round_up(batch, tile_b)
    return tile_b, b_pad


def qnet_kernel(x_ref, w1_ref, b1_ref, w2_ref, b2_ref, w3_ref, b3_ref, o_ref):
    # fc1 + ReLU   (x streamed f32, cast to bf16 for the MXU; f32 accumulate)
    x = x_ref[...].astype(w1_ref.dtype)
    h1 = jnp.dot(x, w1_ref[...], preferred_element_type=jnp.float32) + b1_ref[...]
    h1 = jnp.maximum(h1, 0.0)

    # dropout(p=0.2): eval-mode identity (no-op)

    # fc2 + ReLU
    h2 = jnp.dot(h1.astype(w2_ref.dtype), w2_ref[...],
                 preferred_element_type=jnp.float32) + b2_ref[...]
    h2 = jnp.maximum(h2, 0.0)

    # fc3 (no activation); keep only the real action columns -> (tile_b, A)
    out = jnp.dot(h2.astype(w3_ref.dtype), w3_ref[...],
                  preferred_element_type=jnp.float32) + b3_ref[...]
    o_ref[...] = out[:, : o_ref.shape[-1]].astype(o_ref.dtype)


def prepare_qnetwork_params(params, *, compute_dtype=jnp.bfloat16):
    """One-time: pad feature dims to 128 lanes and cast weights to bf16.

    Do this ONCE (e.g. right after init / after every optimizer step for the
    target network), not on every forward call.
    """
    w1, b1, w2, b2, w3, b3 = (params["w1"], params["b1"], params["w2"],
                              params["b2"], params["w3"], params["b3"])
    S, H = w1.shape
    A = w3.shape[1]
    H_p = _round_up(H, LANE)
    A_p = _round_up(A, LANE)

    def pad_w(w, rows, cols):
        return (jnp.zeros((rows, cols), compute_dtype)
                .at[: w.shape[0], : w.shape[1]].set(w.astype(compute_dtype)))

    def pad_b(b, cols):
        b2d = b.reshape(1, -1).astype(jnp.float32)
        return jnp.zeros((1, cols), jnp.float32).at[:, : b2d.shape[1]].set(b2d)

    return {
        # w1 keeps its tiny contraction dim S unpadded (matches the unpadded x).
        "w1": pad_w(w1, S, H_p), "b1": pad_b(b1, H_p),
        "w2": pad_w(w2, H_p, H_p), "b2": pad_b(b2, H_p),
        "w3": pad_w(w3, H_p, A_p), "b3": pad_b(b3, A_p),
        "state_size": S, "hidden_padded": H_p,
        "action_size": A, "action_padded": A_p,
    }


def qnetwork_forward(x, prep):
    """x: (B, state_size) f32.  prep: output of prepare_qnetwork_params."""
    B, S = x.shape
    assert S == prep["state_size"]
    H_p = prep["hidden_padded"]
    A = prep["action_size"]
    A_p = prep["action_padded"]

    tile_b, B_p = _pick_batch_tiling(B)
    grid = (B_p // tile_b,)

    # Pad only the batch dim of x (and only if actually needed).
    x_p = x if B_p == B else jnp.zeros((B_p, S), x.dtype).at[:B].set(x)

    # Resident operands: constant block index -> fetched once, kept in VMEM.
    resident = lambda shape: pl.BlockSpec(shape, lambda i: (0, 0))

    cost = pl.CostEstimate(
        flops=2 * B_p * (S * H_p + H_p * H_p + H_p * A_p),
        transcendentals=0,
        bytes_accessed=(4 * B_p * S                     # x (f32, unpadded S)
                        + 4 * B_p * A                   # out (f32, unpadded A)
                        + 2 * (S * H_p + H_p * H_p + H_p * A_p)   # bf16 weights
                        + 4 * (2 * H_p + A_p)),         # f32 biases
    )

    out = pl.pallas_call(
        qnet_kernel,
        out_shape=jax.ShapeDtypeStruct((B_p, A), jnp.float32),
        grid=grid,
        in_specs=[
            pl.BlockSpec((tile_b, S), lambda i: (i, 0)),   # x streamed over B
            resident((S, H_p)), resident((1, H_p)),        # fc1 (VMEM-resident)
            resident((H_p, H_p)), resident((1, H_p)),      # fc2
            resident((H_p, A_p)), resident((1, A_p)),      # fc3
        ],
        out_specs=pl.BlockSpec((tile_b, A), lambda i: (i, 0)),
        compiler_params=pltpu.CompilerParams(
            dimension_semantics=("parallel",),  # megacore sharding on v7x
        ),
        cost_estimate=cost,
    )(x_p, prep["w1"], prep["b1"], prep["w2"], prep["b2"], prep["w3"], prep["b3"])

    return out if B_p == B else out[:B]


def init_qnetwork_params(key, state_size, action_size, hidden_size=64):
    """Deterministic init mimicking nn.Linear default U(-1/sqrt(fan_in), +)."""
    ks = jax.random.split(key, 6)

    def linear(kw, kb, fan_in, fan_out):
        bound = 1.0 / jnp.sqrt(jnp.float32(fan_in))
        # stored as (in, out) so the kernel computes x @ W
        w = jax.random.uniform(kw, (fan_in, fan_out), jnp.float32, -bound, bound)
        b = jax.random.uniform(kb, (1, fan_out), jnp.float32, -bound, bound)
        return w, b

    w1, b1 = linear(ks[0], ks[1], state_size, hidden_size)
    w2, b2 = linear(ks[2], ks[3], hidden_size, hidden_size)
    w3, b3 = linear(ks[4], ks[5], hidden_size, action_size)
    return {"w1": w1, "b1": b1, "w2": w2, "b2": b2, "w3": w3, "b3": b3}


def qnetwork_ref(x, p, *, compute_dtype=jnp.bfloat16):
    """Pure-JAX reference using the same bf16-in / f32-accumulate recipe."""
    cd = compute_dtype
    h1 = jnp.maximum(
        jnp.dot(x.astype(cd), p["w1"].astype(cd),
                preferred_element_type=jnp.float32) + p["b1"], 0.0)
    h2 = jnp.maximum(
        jnp.dot(h1.astype(cd), p["w2"].astype(cd),
                preferred_element_type=jnp.float32) + p["b2"], 0.0)
    return jnp.dot(h2.astype(cd), p["w3"].astype(cd),
                   preferred_element_type=jnp.float32) + p["b3"]


if __name__ == "__main__":
    key = jax.random.PRNGKey(0)
    k_param, k_x = jax.random.split(key)

    batch = 8
    state_size = 4   # CartPole-style state
    action_size = 2
    hidden_size = 64

    params = init_qnetwork_params(k_param, state_size, action_size, hidden_size)
    prepared = prepare_qnetwork_params(params)        # one-time pad/cast
    x = jax.random.normal(k_x, (batch, state_size), jnp.float32)

    q_pallas = qnetwork_forward(x, prepared)
    q_pallas = jax.block_until_ready(q_pallas)

    q_ref = qnetwork_ref(x, params)
    assert q_pallas.shape == (batch, action_size)
    assert jnp.allclose(q_pallas, q_ref, atol=1e-3, rtol=1e-3), "mismatch vs reference"

    print("KERNEL_OK")
</pallas_src>

<mosaic_0001>
module attributes {stable_mosaic.version = 11 : i64} {
  func.func @qnet_kernel(%arg0: i32, %arg1: memref<8x4xf32, #tpu.memory_space<vmem>>, %arg2: memref<4x128xbf16, #tpu.memory_space<vmem>>, %arg3: memref<1x128xf32, #tpu.memory_space<vmem>>, %arg4: memref<128x128xbf16, #tpu.memory_space<vmem>>, %arg5: memref<1x128xf32, #tpu.memory_space<vmem>>, %arg6: memref<128x128xbf16, #tpu.memory_space<vmem>>, %arg7: memref<1x128xf32, #tpu.memory_space<vmem>>, %arg8: memref<8x2xf32, #tpu.memory_space<vmem>>) attributes {dimension_semantics = [#tpu.dimension_semantics<parallel>], iteration_bounds = array<i64: 1>, scalar_prefetch = 0 : i64, scratch_operands = 0 : i64, tpu.core_type = #tpu.core_type<tc>, window_params = [{transform_indices = @transform_0, window_bounds = array<i64: 8, 4>}, {pipeline_mode = #tpu.pipeline_mode<synchronous>, transform_indices = @transform_1, window_bounds = array<i64: 4, 128>}, {pipeline_mode = #tpu.pipeline_mode<synchronous>, transform_indices = @transform_2, window_bounds = array<i64: 1, 128>}, {pipeline_mode = #tpu.pipeline_mode<synchronous>, transform_indices = @transform_3, window_bounds = array<i64: 128, 128>}, {pipeline_mode = #tpu.pipeline_mode<synchronous>, transform_indices = @transform_4, window_bounds = array<i64: 1, 128>}, {pipeline_mode = #tpu.pipeline_mode<synchronous>, transform_indices = @transform_5, window_bounds = array<i64: 128, 128>}, {pipeline_mode = #tpu.pipeline_mode<synchronous>, transform_indices = @transform_6, window_bounds = array<i64: 1, 128>}, {transform_indices = @transform_7, window_bounds = array<i64: 8, 2>}]} {
    %c0 = arith.constant 0 : index
    %c0_0 = arith.constant 0 : index
    %0 = vector.load %arg1[%c0, %c0_0] : memref<8x4xf32, #tpu.memory_space<vmem>>, vector<8x4xf32>
    %1 = arith.truncf %0 : vector<8x4xf32> to vector<8x4xbf16>
    %c0_1 = arith.constant 0 : index
    %c0_2 = arith.constant 0 : index
    %2 = vector.load %arg2[%c0_1, %c0_2] : memref<4x128xbf16, #tpu.memory_space<vmem>>, vector<4x128xbf16>
    %cst = arith.constant dense<0.000000e+00> : vector<8x128xf32>
    %3 = tpu.matmul %1, %2, %cst {dimension_numbers = #tpu.dot_dimension_numbers<[1], [0], [0], [1], [0, 0, 1, 1], [], []>} : vector<8x4xbf16>, vector<4x128xbf16>, vector<8x128xf32> -> vector<8x128xf32>
    %c0_3 = arith.constant 0 : index
    %c0_4 = arith.constant 0 : index
    %4 = vector.load %arg3[%c0_3, %c0_4] : memref<1x128xf32, #tpu.memory_space<vmem>>, vector<1x128xf32>
    %5 = vector.broadcast %4 : vector<1x128xf32> to vector<8x128xf32>
    %6 = arith.addf %3, %5 : vector<8x128xf32>
    %cst_5 = arith.constant 0.000000e+00 : f32
    %7 = vector.broadcast %cst_5 : f32 to vector<8x128xf32>
    %8 = arith.maximumf %6, %7 : vector<8x128xf32>
    %9 = arith.truncf %8 : vector<8x128xf32> to vector<8x128xbf16>
    %c0_6 = arith.constant 0 : index
    %c0_7 = arith.constant 0 : index
    %10 = vector.load %arg4[%c0_6, %c0_7] : memref<128x128xbf16, #tpu.memory_space<vmem>>, vector<128x128xbf16>
    %cst_8 = arith.constant dense<0.000000e+00> : vector<8x128xf32>
    %11 = tpu.matmul %9, %10, %cst_8 {dimension_numbers = #tpu.dot_dimension_numbers<[1], [0], [0], [1], [0, 0, 1, 1], [], []>} : vector<8x128xbf16>, vector<128x128xbf16>, vector<8x128xf32> -> vector<8x128xf32>
    %c0_9 = arith.constant 0 : index
    %c0_10 = arith.constant 0 : index
    %12 = vector.load %arg5[%c0_9, %c0_10] : memref<1x128xf32, #tpu.memory_space<vmem>>, vector<1x128xf32>
    %13 = vector.broadcast %12 : vector<1x128xf32> to vector<8x128xf32>
    %14 = arith.addf %11, %13 : vector<8x128xf32>
    %cst_11 = arith.constant 0.000000e+00 : f32
    %15 = vector.broadcast %cst_11 : f32 to vector<8x128xf32>
    %16 = arith.maximumf %14, %15 : vector<8x128xf32>
    %17 = arith.truncf %16 : vector<8x128xf32> to vector<8x128xbf16>
    %c0_12 = arith.constant 0 : index
    %c0_13 = arith.constant 0 : index
    %18 = vector.load %arg6[%c0_12, %c0_13] : memref<128x128xbf16, #tpu.memory_space<vmem>>, vector<128x128xbf16>
    %cst_14 = arith.constant dense<0.000000e+00> : vector<8x128xf32>
    %19 = tpu.matmul %17, %18, %cst_14 {dimension_numbers = #tpu.dot_dimension_numbers<[1], [0], [0], [1], [0, 0, 1, 1], [], []>} : vector<8x128xbf16>, vector<128x128xbf16>, vector<8x128xf32> -> vector<8x128xf32>
    %c0_15 = arith.constant 0 : index
    %c0_16 = arith.constant 0 : index
    %20 = vector.load %arg7[%c0_15, %c0_16] : memref<1x128xf32, #tpu.memory_space<vmem>>, vector<1x128xf32>
    %21 = vector.broadcast %20 : vector<1x128xf32> to vector<8x128xf32>
    %22 = arith.addf %19, %21 : vector<8x128xf32>
    %23 = vector.extract_strided_slice %22 {offsets = [0, 0], sizes = [8, 2], strides = [1, 1]} : vector<8x128xf32> to vector<8x2xf32>
    %c0_17 = arith.constant 0 : index
    %c0_18 = arith.constant 0 : index
    %24 = vector.load %arg8[%c0_17, %c0_18] : memref<8x2xf32, #tpu.memory_space<vmem>>, vector<8x2xf32>
    tpu.vector_store %arg8[%c0_17, %c0_18], %23 {strides = array<i32>} : memref<8x2xf32, #tpu.memory_space<vmem>>, vector<8x2xf32>,
    return
  }
  func.func @transform_0(%arg0: i32) -> (i32, i32) {
    %c0_i32 = arith.constant 0 : i32
    %c0_i32_0 = arith.constant 0 : i32
    return %arg0, %c0_i32 : i32, i32
  }
  func.func @transform_1(%arg0: i32) -> (i32, i32) {
    %c0_i32 = arith.constant 0 : i32
    %c0_i32_0 = arith.constant 0 : i32
    %c0_i32_1 = arith.constant 0 : i32
    return %c0_i32, %c0_i32_0 : i32, i32
  }
  func.func @transform_2(%arg0: i32) -> (i32, i32) {
    %c0_i32 = arith.constant 0 : i32
    %c0_i32_0 = arith.constant 0 : i32
    %c0_i32_1 = arith.constant 0 : i32
    return %c0_i32, %c0_i32_0 : i32, i32
  }
  func.func @transform_3(%arg0: i32) -> (i32, i32) {
    %c0_i32 = arith.constant 0 : i32
    %c0_i32_0 = arith.constant 0 : i32
    %c0_i32_1 = arith.constant 0 : i32
    return %c0_i32, %c0_i32_0 : i32, i32
  }
  func.func @transform_4(%arg0: i32) -> (i32, i32) {
    %c0_i32 = arith.constant 0 : i32
    %c0_i32_0 = arith.constant 0 : i32
    %c0_i32_1 = arith.constant 0 : i32
    return %c0_i32, %c0_i32_0 : i32, i32
  }
  func.func @transform_5(%arg0: i32) -> (i32, i32) {
    %c0_i32 = arith.constant 0 : i32
    %c0_i32_0 = arith.constant 0 : i32
    %c0_i32_1 = arith.constant 0 : i32
    return %c0_i32, %c0_i32_0 : i32, i32
  }
  func.func @transform_6(%arg0: i32) -> (i32, i32) {
    %c0_i32 = arith.constant 0 : i32
    %c0_i32_0 = arith.constant 0 : i32
    %c0_i32_1 = arith.constant 0 : i32
    return %c0_i32, %c0_i32_0 : i32, i32
  }
  func.func @transform_7(%arg0: i32) -> (i32, i32) {
    %c0_i32 = arith.constant 0 : i32
    %c0_i32_0 = arith.constant 0 : i32
    return %arg0, %c0_i32 : i32, i32
  }
}

</mosaic_0001>

<llo_original>
// kernel: tpu_custom_call.1
$region0: #{tpu_custom_call.1}
  #allocation0 [shape = 'u32[]', space=smem, size = 0x4, offset = 0x4, fixed_abs, tag = 'smem constant byte address 0x4 - core index']
  #allocation1 [shape = 'u32[144,128]{1,0:T(1,128)}', space=vmem, size = 0x12000, scoped, tag = 'internal scratch']
  %s0 = inlined_call_operand.vmem [shape: f32[8,4], index: 0, kind: input, shape index: {}]
  %s1 = inlined_call_operand.vmem [shape: bf16[4,128], index: 1, kind: input, shape index: {}]
  %s2 = inlined_call_operand.vmem [shape: f32[1,128], index: 2, kind: input, shape index: {}]
  %s3 = inlined_call_operand.hbm [shape: bf16[128,128], index: 3, kind: input, shape index: {}]
  %s4 = inlined_call_operand.vmem [shape: f32[1,128], index: 4, kind: input, shape index: {}]
  %s5 = inlined_call_operand.hbm [shape: bf16[128,128], index: 5, kind: input, shape index: {}]
  %s6 = inlined_call_operand.vmem [shape: f32[1,128], index: 6, kind: input, shape index: {}]
  %s7 = inlined_call_operand.vmem [shape: f32[8,2], index: 7, kind: output, shape index: {}]
  %s8 = sld [smem:[#allocation0]]
  $region46: #{tpu_custom_call.1} parent=0
    _
  %s10 = ssub.s32 1, %s8
  %s11 = scalar_select 0, %s10, %s8
  $region1: #{tpu_custom_call.1} parent=0
    #allocation2 [shape = 'u8[32768]{0}', space=vmem, size = 0x8000, scoped, tag = 'input window, operand 3, single buffered']
    #allocation3 [shape = 's32[1]{0}', space=sflag, size = 0x4, scoped, tag = 'scoped memory for tpu_custom_call.1']
    #allocation4 [shape = 'u8[32768]{0}', space=vmem, size = 0x8000, scoped, tag = 'input window, operand 5, single buffered']
    #allocation5 [shape = 's32[1]{0}', space=sflag, size = 0x4, scoped, tag = 'scoped memory for tpu_custom_call.1']
    %12 = vsyncpa [#allocation3], 0
    %13 = vsyncpa [#allocation5], 0
    // Predicated region
    $region2: #{tpu_custom_call.1} parent=1 // pred_check
      _
    $region3: #{tpu_custom_call.1} parent=1 // pred_check_branch
      %15 = sbr.rel (0) target = $region5
    $region4: #{tpu_custom_call.1} parent=1 // pred_region
      _
    $region5: #{tpu_custom_call.1} parent=1 // pred_fallthru
      _
    // Predicated region
    $region6: #{tpu_custom_call.1} parent=1 // pred_check
      _
    $region7: #{tpu_custom_call.1} parent=1 // pred_check_branch
      %17 = sbr.rel (0) target = $region9
    $region8: #{tpu_custom_call.1} parent=1 // pred_region
      _
    $region9: #{tpu_custom_call.1} parent=1 // pred_fallthru
      _
    // Predicated region
    $region10: #{tpu_custom_call.1} parent=1 // pred_check
      _
    $region11: #{tpu_custom_call.1} parent=1 // pred_check_branch
      %19 = sbr.rel (0) target = $region13
    $region12: #{tpu_custom_call.1} parent=1 // pred_region
      _
    $region13: #{tpu_custom_call.1} parent=1 // pred_fallthru
      _
    // Predicated region
    $region14: #{tpu_custom_call.1} parent=1 // pred_check
      _
    $region15: #{tpu_custom_call.1} parent=1 // pred_check_branch
      %21 = sbr.rel (0) target = $region17
    $region16: #{tpu_custom_call.1} parent=1 // pred_region
      %s23 = ssub.s32 1024, 1024
      %24 = vsyncadd [#allocation3], %s23
      %s25 = sshll.u32 [#allocation2], 4
      %s26 = int_to_ptr.vmem [resolvable:$true] %s25
      %31 = dma.hbm_to_vmem [thread:$0]  %s3, 1024, %s26, [#allocation3], 64, 64, 4
    $region17: #{tpu_custom_call.1} parent=1 // pred_fallthru
      _
    // Predicated region
    $region18: #{tpu_custom_call.1} parent=1 // pred_check
      _
    $region19: #{tpu_custom_call.1} parent=1 // pred_check_branch
      %33 = sbr.rel (0) target = $region21
    $region20: #{tpu_custom_call.1} parent=1 // pred_region
      _
    $region21: #{tpu_custom_call.1} parent=1 // pred_fallthru
      _
    // Predicated region
    $region22: #{tpu_custom_call.1} parent=1 // pred_check
      _
    $region23: #{tpu_custom_call.1} parent=1 // pred_check_branch
      %35 = sbr.rel (0) target = $region25
    $region24: #{tpu_custom_call.1} parent=1 // pred_region
      %s37 = ssub.s32 1024, 1024
      %38 = vsyncadd [#allocation5], %s37
      %s39 = sshll.u32 [#allocation4], 4
      %s40 = int_to_ptr.vmem [resolvable:$true] %s39
      %45 = dma.hbm_to_vmem [thread:$0]  %s5, 1024, %s40, [#allocation5], 64, 64, 4
    $region25: #{tpu_custom_call.1} parent=1 // pred_fallthru
      _
    // Predicated region
    $region26: #{tpu_custom_call.1} parent=1 // pred_check
      _
    $region27: #{tpu_custom_call.1} parent=1 // pred_check_branch
      %47 = sbr.rel (0) target = $region29
    $region28: #{tpu_custom_call.1} parent=1 // pred_region
      _
    $region29: #{tpu_custom_call.1} parent=1 // pred_fallthru
      _
    // Predicated region
    $region30: #{tpu_custom_call.1} parent=1 // pred_check
      _
    $region31: #{tpu_custom_call.1} parent=1 // pred_check_branch
      %49 = sbr.rel (0) target = $region33
    $region32: #{tpu_custom_call.1} parent=1 // pred_region
      %50 = dma.done [#allocation3], 1024
    $region33: #{tpu_custom_call.1} parent=1 // pred_fallthru
      _
    // Predicated region
    $region34: #{tpu_custom_call.1} parent=1 // pred_check
      _
    $region35: #{tpu_custom_call.1} parent=1 // pred_check_branch
      %52 = sbr.rel (0) target = $region37
    $region36: #{tpu_custom_call.1} parent=1 // pred_region
      %53 = dma.done [#allocation5], 1024
    $region37: #{tpu_custom_call.1} parent=1 // pred_fallthru
      _
    %v55 = vld [vmem:[%s0] sm:$0xff]
    %v56 = vpack.c.bf16 %v55, %v55
    %v57 = vld [vmem:[%s1] sm:$0x3]
    %v58 = vld [vmem:[%s2] sm:$0x1]
    %v60 = vlaneseq
    %v61 = vshrl.u32 %v60, 7
    %v62 = vsub.s32 0, %v61
    %v63 = vrot.slane %v58, %v62
    %vm65 = vcmask 31744
    %v67 = vsel %vm65, %v56, 0
    %vm69 = vcmask 1041408
    %v71 = vsel %vm69, %v57, 0
    %73 = vmatprep.subr.bf16.mxu0 0
    %74 = vmatpush1.bf16.msra.mxu0 %v71
    %75 = vmatprep.subr.bf16.mxu0 0
    %76 = vmatpush1.bf16.msra.mxu0 0
    %77 = vmatprep.subr.bf16.mxu0 0
    %78 = vmatpush1.bf16.msra.mxu0 0
    %79 = vmatprep.subr.bf16.mxu0 0
    %80 = vmatpush1.bf16.msra.mxu0 0
    %81 = vmatprep.subr.bf16.mxu0 0
    %82 = vmatpush1.bf16.msra.mxu0 0
    %83 = vmatprep.subr.bf16.mxu0 0
    %84 = vmatpush1.bf16.msra.mxu0 0
    %85 = vmatprep.subr.bf16.mxu0 0
    %86 = vmatpush1.bf16.msra.mxu0 0
    %87 = vmatprep.subr.bf16.mxu0 0
    %88 = vmatpush1.bf16.msra.mxu0 0
    %89 = vmatprep.subr.bf16.mxu0 0
    %90 = vmatpush1.bf16.msra.mxu0 0
    %91 = vmatprep.subr.bf16.mxu0 0
    %92 = vmatpush1.bf16.msra.mxu0 0
    %93 = vmatprep.subr.bf16.mxu0 0
    %94 = vmatpush1.bf16.msra.mxu0 0
    %95 = vmatprep.subr.bf16.mxu0 0
    %96 = vmatpush1.bf16.msra.mxu0 0
    %97 = vmatprep.subr.bf16.mxu0 0
    %98 = vmatpush1.bf16.msra.mxu0 0
    %99 = vmatprep.subr.bf16.mxu0 0
    %100 = vmatpush1.bf16.msra.mxu0 0
    %101 = vmatprep.subr.bf16.mxu0 0
    %102 = vmatpush1.bf16.msra.mxu0 0
    %103 = vmatprep.subr.bf16.mxu0 0
    %104 = vmatpush1.bf16.msra.mxu0 0
    %105 = vmatprep.mubr.bf16.mxu0 0
    %106 = vmatmul.mubr.bf16.gmra.mrb[0].mxu0 %v67
    %v107 = vpop.f32.mrb[0].mxu0
    %v108 = vadd.f32 %v63, %v107
    %v109 = vpop.f32.mrb[0].mxu0
    %v110 = vpop.f32.mrb[0].mxu0
    %v111 = vpop.f32.mrb[0].mxu0
    %112 = vdwg.mxu0
    %v113 = vmax.f32 %v108, 0.0
    %v114 = vpack.c.bf16 %v113, %v113
    %v115 = vld [vmem:[#allocation2] sm:$0xf]
    %v116 = vld [vmem:[#allocation2 + $0x4] sm:$0xf]
    %v117 = vld [vmem:[#allocation2 + $0x8] sm:$0xf]
    %v118 = vld [vmem:[#allocation2 + $0xc] sm:$0xf]
    %v119 = vld [vmem:[#allocation2 + $0x10] sm:$0xf]
    %v120 = vld [vmem:[#allocation2 + $0x14] sm:$0xf]
    %v121 = vld [vmem:[#allocation2 + $0x18] sm:$0xf]
    %v122 = vld [vmem:[#allocation2 + $0x1c] sm:$0xf]
    %v123 = vld [vmem:[#allocation2 + $0x20] sm:$0xf]
    %v124 = vld [vmem:[#allocation2 + $0x24] sm:$0xf]
    %v125 = vld [vmem:[#allocation2 + $0x28] sm:$0xf]
    %v126 = vld [vmem:[#allocation2 + $0x2c] sm:$0xf]
    %v127 = vld [vmem:[#allocation2 + $0x30] sm:$0xf]
    %v128 = vld [vmem:[#allocation2 + $0x34] sm:$0xf]
    %v129 = vld [vmem:[#allocation2 + $0x38] sm:$0xf]
    %v130 = vld [vmem:[#allocation2 + $0x3c] sm:$0xf]
    %v131 = vld [vmem:[%s4] sm:$0x1]
    %v133 = vlaneseq
    %v134 = vshrl.u32 %v133, 7
    %v135 = vsub.s32 0, %v134
    %v136 = vrot.slane %v131, %v135
    %v154 = vunpack.c.l.b16 %v115
    %v155 = vunpack.c.l.b16 %v116
    %v156 = vunpack.c.l.b16 %v117
    %v157 = vunpack.c.l.b16 %v118
    %v158 = vunpack.c.l.b16 %v119
    %v159 = vunpack.c.l.b16 %v120
    %v160 = vunpack.c.l.b16 %v121
    %v161 = vunpack.c.l.b16 %v122
    %v162 = vunpack.c.l.b16 %v123
    %v163 = vunpack.c.l.b16 %v124
    %v164 = vunpack.c.l.b16 %v125
    %v165 = vunpack.c.l.b16 %v126
    %v166 = vunpack.c.l.b16 %v127
    %v167 = vunpack.c.l.b16 %v128
    %v168 = vunpack.c.l.b16 %v129
    %v169 = vunpack.c.l.b16 %v130
    %v170 = vpack.c.b16 %v155, %v154
    %v171 = vpack.c.b16 %v157, %v156
    %v172 = vpack.c.b16 %v159, %v158
    %v173 = vpack.c.b16 %v161, %v160
    %v174 = vpack.c.b16 %v163, %v162
    %v175 = vpack.c.b16 %v165, %v164
    %v176 = vpack.c.b16 %v167, %v166
    %v177 = vpack.c.b16 %v169, %v168
    %186 = vmatprep.subr.bf16.mxu0 0
    %187 = vmatpush1.bf16.msra.mxu0 %v170
    %188 = vmatprep.subr.bf16.mxu0 0
    %189 = vmatpush1.bf16.msra.mxu0 %v171
    %190 = vmatprep.subr.bf16.mxu0 0
    %191 = vmatpush1.bf16.msra.mxu0 %v172
    %192 = vmatprep.subr.bf16.mxu0 0
    %193 = vmatpush1.bf16.msra.mxu0 %v173
    %194 = vmatprep.subr.bf16.mxu0 0
    %195 = vmatpush1.bf16.msra.mxu0 %v174
    %196 = vmatprep.subr.bf16.mxu0 0
    %197 = vmatpush1.bf16.msra.mxu0 %v175
    %198 = vmatprep.subr.bf16.mxu0 0
    %199 = vmatpush1.bf16.msra.mxu0 %v176
    %200 = vmatprep.subr.bf16.mxu0 0
    %201 = vmatpush1.bf16.msra.mxu0 %v177
    %202 = vmatprep.subr.bf16.mxu0 0
    %203 = vmatpush1.bf16.msra.mxu0 0
    %204 = vmatprep.subr.bf16.mxu0 0
    %205 = vmatpush1.bf16.msra.mxu0 0
    %206 = vmatprep.subr.bf16.mxu0 0
    %207 = vmatpush1.bf16.msra.mxu0 0
    %208 = vmatprep.subr.bf16.mxu0 0
    %209 = vmatpush1.bf16.msra.mxu0 0
    %210 = vmatprep.subr.bf16.mxu0 0
    %211 = vmatpush1.bf16.msra.mxu0 0
    %212 = vmatprep.subr.bf16.mxu0 0
    %213 = vmatpush1.bf16.msra.mxu0 0
    %214 = vmatprep.subr.bf16.mxu0 0
    %215 = vmatpush1.bf16.msra.mxu0 0
    %216 = vmatprep.subr.bf16.mxu0 0
    %217 = vmatpush1.bf16.msra.mxu0 0
    %218 = vmatprep.mubr.bf16.mxu0 0
    %219 = vmatmul.mubr.bf16.gmra.mrb[0].mxu0 %v114
    %v220 = vpop.f32.mrb[0].mxu0
    %v221 = vadd.f32 %v136, %v220
    %v222 = vpop.f32.mrb[0].mxu0
    %v223 = vpop.f32.mrb[0].mxu0
    %v224 = vpop.f32.mrb[0].mxu0
    %225 = vdwg.mxu0
    %v226 = vmax.f32 %v221, 0.0
    %v227 = vpack.c.bf16 %v226, %v226
    %v228 = vld [vmem:[#allocation4] sm:$0xf]
    %v229 = vld [vmem:[#allocation4 + $0x4] sm:$0xf]
    %v230 = vld [vmem:[#allocation4 + $0x8] sm:$0xf]
    %v231 = vld [vmem:[#allocation4 + $0xc] sm:$0xf]
    %v232 = vld [vmem:[#allocation4 + $0x10] sm:$0xf]
    %v233 = vld [vmem:[#allocation4 + $0x14] sm:$0xf]
    %v234 = vld [vmem:[#allocation4 + $0x18] sm:$0xf]
    %v235 = vld [vmem:[#allocation4 + $0x1c] sm:$0xf]
    %v236 = vld [vmem:[#allocation4 + $0x20] sm:$0xf]
    %v237 = vld [vmem:[#allocation4 + $0x24] sm:$0xf]
    %v238 = vld [vmem:[#allocation4 + $0x28] sm:$0xf]
    %v239 = vld [vmem:[#allocation4 + $0x2c] sm:$0xf]
    %v240 = vld [vmem:[#allocation4 + $0x30] sm:$0xf]
    %v241 = vld [vmem:[#allocation4 + $0x34] sm:$0xf]
    %v242 = vld [vmem:[#allocation4 + $0x38] sm:$0xf]
    %v243 = vld [vmem:[#allocation4 + $0x3c] sm:$0xf]
    %v244 = vld [vmem:[%s6] sm:$0x1]
    %v246 = vlaneseq
    %v247 = vshrl.u32 %v246, 7
    %v248 = vsub.s32 0, %v247
    %v249 = vrot.slane %v244, %v248
    %v267 = vunpack.c.l.b16 %v228
    %v268 = vunpack.c.l.b16 %v229
    %v269 = vunpack.c.l.b16 %v230
    %v270 = vunpack.c.l.b16 %v231
    %v271 = vunpack.c.l.b16 %v232
    %v272 = vunpack.c.l.b16 %v233
    %v273 = vunpack.c.l.b16 %v234
    %v274 = vunpack.c.l.b16 %v235
    %v275 = vunpack.c.l.b16 %v236
    %v276 = vunpack.c.l.b16 %v237
    %v277 = vunpack.c.l.b16 %v238
    %v278 = vunpack.c.l.b16 %v239
    %v279 = vunpack.c.l.b16 %v240
    %v280 = vunpack.c.l.b16 %v241
    %v281 = vunpack.c.l.b16 %v242
    %v282 = vunpack.c.l.b16 %v243
    %v283 = vpack.c.b16 %v268, %v267
    %v284 = vpack.c.b16 %v270, %v269
    %v285 = vpack.c.b16 %v272, %v271
    %v286 = vpack.c.b16 %v274, %v273
    %v287 = vpack.c.b16 %v276, %v275
    %v288 = vpack.c.b16 %v278, %v277
    %v289 = vpack.c.b16 %v280, %v279
    %v290 = vpack.c.b16 %v282, %v281
    %299 = vmatprep.subr.bf16.mxu0 0
    %300 = vmatpush1.bf16.msra.mxu0 %v283
    %301 = vmatprep.subr.bf16.mxu0 0
    %302 = vmatpush1.bf16.msra.mxu0 %v284
    %303 = vmatprep.subr.bf16.mxu0 0
    %304 = vmatpush1.bf16.msra.mxu0 %v285
    %305 = vmatprep.subr.bf16.mxu0 0
    %306 = vmatpush1.bf16.msra.mxu0 %v286
    %307 = vmatprep.subr.bf16.mxu0 0
    %308 = vmatpush1.bf16.msra.mxu0 %v287
    %309 = vmatprep.subr.bf16.mxu0 0
    %310 = vmatpush1.bf16.msra.mxu0 %v288
    %311 = vmatprep.subr.bf16.mxu0 0
    %312 = vmatpush1.bf16.msra.mxu0 %v289
    %313 = vmatprep.subr.bf16.mxu0 0
    %314 = vmatpush1.bf16.msra.mxu0 %v290
    %315 = vmatprep.subr.bf16.mxu0 0
    %316 = vmatpush1.bf16.msra.mxu0 0
    %317 = vmatprep.subr.bf16.mxu0 0
    %318 = vmatpush1.bf16.msra.mxu0 0
    %319 = vmatprep.subr.bf16.mxu0 0
    %320 = vmatpush1.bf16.msra.mxu0 0
    %321 = vmatprep.subr.bf16.mxu0 0
    %322 = vmatpush1.bf16.msra.mxu0 0
    %323 = vmatprep.subr.bf16.mxu0 0
    %324 = vmatpush1.bf16.msra.mxu0 0
    %325 = vmatprep.subr.bf16.mxu0 0
    %326 = vmatpush1.bf16.msra.mxu0 0
    %327 = vmatprep.subr.bf16.mxu0 0
    %328 = vmatpush1.bf16.msra.mxu0 0
    %329 = vmatprep.subr.bf16.mxu0 0
    %330 = vmatpush1.bf16.msra.mxu0 0
    %331 = vmatprep.mubr.bf16.mxu0 0
    %332 = vmatmul.mubr.bf16.gmra.mrb[0].mxu0 %v227
    %v333 = vpop.f32.mrb[0].mxu0
    %v334 = vadd.f32 %v249, %v333
    %v335 = vpop.f32.mrb[0].mxu0
    %v336 = vpop.f32.mrb[0].mxu0
    %v337 = vpop.f32.mrb[0].mxu0
    %338 = vdwg.mxu0
    %vm339 = vcmask 15360
    %340 = vst.msk [vmem:[%s7] sm:$0xff] %vm339, %v334
    // Predicated region
    $region38: #{tpu_custom_call.1} parent=1 // pred_check
      _
    $region39: #{tpu_custom_call.1} parent=1 // pred_check_branch
      %342 = sbr.rel (0) target = $region41
    $region40: #{tpu_custom_call.1} parent=1 // pred_region
      _
    $region41: #{tpu_custom_call.1} parent=1 // pred_fallthru
      _
    // Predicated region
    $region42: #{tpu_custom_call.1} parent=1 // pred_check
      _
    $region43: #{tpu_custom_call.1} parent=1 // pred_check_branch
      %344 = sbr.rel (0) target = $region45
    $region44: #{tpu_custom_call.1} parent=1 // pred_region
      _
    $region45: #{tpu_custom_call.1} parent=1 // pred_fallthru
      _
    %345 = vsyncpa [#allocation3], 1
    %346 = vsyncpa [#allocation5], 1

</llo_original>
